<compile_context>
chip_gen: v6e
topology: v6e:2x2x1
jax: 0.10.0
libtpu: 0.0.40
codegen_flags: <defaults>
</compile_context>

<pallas_src>
import functools
import math

import jax
import jax.numpy as jnp
from jax import lax
from jax.experimental import pallas as pl
from jax.experimental.pallas import tpu as pltpu


NUM_CH_DEC = (16, 32, 64, 128, 256)


def _pick_row_tile(h):
    """Output rows handled per grid step.

    In NHCW the row axis is NOT one of the two tiled (sublane/lane) dims, so
    any divisor of H is a legal block size.  Large images are split into two
    row blocks so the ("parallel", "parallel") grid gives v7x's two
    TensorCores >= 2 blocks per batch element; tiny images stay whole.
    """
    if h % 8 != 0:
        return h
    half = h // 2
    return half if (half % 8 == 0 and half >= 8) else 8


def _src_row(r, ky, h_out, upsampled):
    """Source-row index for output row `r` and vertical tap `ky` in {0,1,2}.

    Implements ReflectionPad2d(1) along H on the conv's (possibly 2x
    row-upsampled) input grid.  For an upsampled input the nearest-neighbour
    row duplication is folded in via `// 2`, so the 2x-tall upsampled tensor
    is never materialised (perf-review item: fuse the upsample into the
    conv's input indexing).
    """
    u = r + (ky - 1)
    u = jnp.abs(u)                                           # top edge: -1 -> 1
    u = jnp.where(u > h_out - 1, 2 * (h_out - 1) - u, u)     # bottom edge
    if upsampled:
        u = u // 2
    return u


# ---------------------------------------------------------------------------
# Fused ConvBlock kernel: reflect-pad(1) + 3x3 conv (+concat, +row-upsample)
#                         + bias + ELU, one MXU dot per output row.
# ---------------------------------------------------------------------------
def _make_convblock_kernel(cins, upsampled, h_out, w_out, th, apply_elu,
                           out_dtype):
    n = len(cins)

    def kernel(*refs):
        x_refs = refs[:n]          # input j: (1, Hj, Cj, W) bf16, whole image
        w_ref = refs[n]            # (Cout, K) bf16, K = 9 * sum(Cj)
        b_ref = refs[n + 1]        # (Cout, 1) f32
        o_ref = refs[n + 2]        # (1, th, Cout, W)

        r0 = pl.program_id(1) * th

        def row_body(i, carry):
            r = r0 + i
            pieces = []
            for j in range(n):                       # fused skip-concat
                xr = x_refs[j]
                for ky in range(3):
                    u = _src_row(r, ky, h_out, upsampled[j])
                    row = xr[0, u, :, :]             # (Cj, W), untiled row idx
                    # ReflectionPad2d(1) along W (lane axis), fused in-kernel.
                    left = jnp.concatenate(
                        [row[:, 1:2], row[:, :w_out - 1]], axis=1)
                    right = jnp.concatenate(
                        [row[:, 1:], row[:, w_out - 2:w_out - 1]], axis=1)
                    pieces += [left, row, right]     # kx = 0, 1, 2
            # K-fold (perf review): all 9 taps of all inputs become one
            # contraction dimension -> a single MXU dot and a single
            # accumulator update per output row.
            a = jnp.concatenate(pieces, axis=0)                  # (K, W) bf16
            acc = jnp.dot(w_ref[...], a,
                          preferred_element_type=jnp.float32)    # (Cout, W)
            acc = acc + b_ref[...]
            if apply_elu:
                # ELU(alpha=1): x if x > 0 else exp(x) - 1   (f32)
                acc = jnp.where(acc > 0.0, acc,
                                jnp.exp(jnp.minimum(acc, 0.0)) - 1.0)
            # Lane-dense store: W sits on lanes, Cout on sublanes (perf review:
            # no masked sub-128-lane stores for the Cout=16/32/64 levels).
            o_ref[0, i, :, :] = acc.astype(out_dtype)
            return carry

        lax.fori_loop(0, th, row_body, 0, unroll=th <= 8)

    return kernel


def conv_block(xs, ws, bias, *, row_upsampled=None, apply_elu=True,
               out_dtype=jnp.bfloat16):
    """Fused monodepth2 ConvBlock: ReflectionPad2d(1) + Conv2d(3x3, bias) + ELU.

    Operates on NHCW (batch, row, channel, column) tensors.

    xs  : list of NHCW inputs.  Input j has shape (B, Hj, Cj, W); if
          row_upsampled[j] the conv consumes its 2x nearest row-upsampled
          version (Hj * 2 == H_out) via index math, never materialised.
          A channel-concat of the inputs is fused by splitting the weight
          along its input-channel axis (ws[j] pairs with xs[j], concat order).
    ws  : list of OIHW (Cout, Cj, 3, 3) weights (PyTorch layout).
    bias: (Cout,).
    """
    n = len(xs)
    assert n == len(ws) and n >= 1
    if row_upsampled is None:
        row_upsampled = (False,) * n
    row_upsampled = tuple(bool(u) for u in row_upsampled)

    b = int(xs[0].shape[0])
    w_out = int(xs[0].shape[3])
    h_out = int(xs[0].shape[1]) * (2 if row_upsampled[0] else 1)
    cout = int(ws[0].shape[0])
    cins = tuple(int(x.shape[2]) for x in xs)
    assert h_out >= 2 and w_out >= 2, "ReflectionPad2d(1) needs H, W >= 2"
    for x, wt, c, up in zip(xs, ws, cins, row_upsampled):
        assert int(x.shape[0]) == b and int(x.shape[3]) == w_out
        assert int(x.shape[1]) * (2 if up else 1) == h_out
        assert tuple(wt.shape) == (cout, c, 3, 3)

    k_tot = 9 * sum(cins)
    # Fold all 9 taps of all inputs into one (Cout, K) matrix; row order
    # matches the in-kernel operand build: input j, then ky, then kx, with the
    # Cj channels innermost.
    wfold = jnp.concatenate(
        [wt[:, :, ky, kx] for wt in ws for ky in range(3) for kx in range(3)],
        axis=1).astype(jnp.bfloat16)                         # (Cout, K)
    bcol = bias.astype(jnp.float32).reshape(cout, 1)

    th = _pick_row_tile(h_out)
    kernel = _make_convblock_kernel(cins, row_upsampled, h_out, w_out, th,
                                    apply_elu, out_dtype)
    in_specs = (
        # Whole (small) image resident in VMEM per batch element; the block
        # index only depends on the batch axis so Pallas re-DMAs it once per
        # image, not per row block.  Weights / bias are resident for the call.
        [pl.BlockSpec((1, int(x.shape[1]), c, w_out),
                      lambda bb, rr: (bb, 0, 0, 0))
         for x, c in zip(xs, cins)]
        + [pl.BlockSpec((cout, k_tot), lambda bb, rr: (0, 0)),
           pl.BlockSpec((cout, 1), lambda bb, rr: (0, 0))]
    )
    return pl.pallas_call(
        kernel,
        out_shape=jax.ShapeDtypeStruct((b, h_out, cout, w_out), out_dtype),
        grid=(b, h_out // th),
        in_specs=in_specs,
        out_specs=pl.BlockSpec((1, th, cout, w_out),
                               lambda bb, rr: (bb, rr, 0, 0)),
        compiler_params=pltpu.CompilerParams(
            dimension_semantics=("parallel", "parallel")),
        # NOTE: per-call VMEM residency is ~1-2 MiB, far below every chip's
        # default scoped limit, so vmem_limit_bytes is intentionally NOT set
        # (perf-review item: don't reserve 48 MiB of v7x's 64 MiB VMEM).
    )(*[x.astype(jnp.bfloat16) for x in xs], wfold, bcol)


# ---------------------------------------------------------------------------
# Module glue
# ---------------------------------------------------------------------------
def init_params(key, num_ch_enc):
    """Decoder conv parameters (PyTorch OIHW layout), deterministic."""
    params = {}
    cnt = [0]

    def nkey():
        cnt[0] += 1
        return jax.random.fold_in(key, cnt[0])

    def conv2d_p(cin, cout):
        w = jax.random.normal(nkey(), (cout, cin, 3, 3), jnp.float32) / math.sqrt(9 * cin)
        b = 0.01 * jax.random.normal(nkey(), (cout,), jnp.float32)
        return w, b

    for i in range(4, -1, -1):
        cin = num_ch_enc[-1] if i == 4 else NUM_CH_DEC[i + 1]
        params[("upconv", i, 0)] = conv2d_p(cin, NUM_CH_DEC[i])
        cin = NUM_CH_DEC[i] + (num_ch_enc[i - 1] if i > 0 else 0)
        params[("upconv", i, 1)] = conv2d_p(cin, NUM_CH_DEC[i])
    # ("depth_expand", i) / ("depth_3dcnn", i) parameters are not materialised:
    # their outputs only feed torch.softmax(..., dim=1) over a size-1 dimension
    # (Conv3DBlock.convout emits ONE channel), so they provably cannot
    # influence the module outputs -- see depth_decoder3d_forward.
    return params


def depth_decoder3d_forward(input_features_nchw, params, *, scales=(0, 1, 2, 3),
                            mono_bins=8, reg_c=4, min_d=0.1, max_d=10.0,
                            return_features=False):
    del reg_c  # only shapes the (provably dead) cost-volume branch
    # Encoder features arrive NCHW (PyTorch); the kernels run on NHCW bf16 so
    # the row axis is untiled (cheap dynamic indexing) and W sits on lanes.
    feats = [jnp.transpose(f, (0, 2, 1, 3)).astype(jnp.bfloat16)
             for f in input_features_nchw]
    # discret == 'UD'.  TODO(synk): 'SID' discretisation not implemented.
    depth_grid = jnp.linspace(min_d, max_d, mono_bins, dtype=jnp.float32)
    mono_depth_const = jnp.sum(depth_grid)

    outputs = {}
    x = feats[-1]
    for i in range(4, -1, -1):
        w, b = params[("upconv", i, 0)]
        x = conv_block([x], [w], b)                          # ConvBlock + ELU
        # nearest 2x upsample: only the column duplication is done here (a tiny
        # XLA repeat); the row duplication is fused into the next conv's row
        # indexing, so the full-size upsampled tensor never round-trips HBM.
        x = jnp.repeat(x, 2, axis=3)
        w, b = params[("upconv", i, 1)]
        if i > 0:
            # torch.cat([upsample(x), enc_feat], dim=1) fused into the conv by
            # splitting the weight along its input-channel axis (concat order).
            c1 = NUM_CH_DEC[i]
            xs = [x, feats[i - 1]]
            ws = [w[:, :c1], w[:, c1:]]
            ups = (True, False)
        else:
            xs, ws, ups = [x], [w], (True,)
        x = conv_block(xs, ws, b, row_upsampled=ups)         # ConvBlock + ELU
        if i in scales:
            # Reference head: depth_expand -> reshape(B, reg_c, bins, H, W) ->
            # Conv3DBlock (its final conv emits ONE channel) -> softmax(dim=1)
            # over that size-1 dim (identically 1) -> (prob * depth_grid).sum(1).
            # The result is therefore the constant sum(depth_grid), independent
            # of the cost volume, so the dead compute is skipped and the
            # constant is emitted directly (perf-review item).
            bsz, hh, _, ww = x.shape
            outputs[("mono_depth", i)] = jnp.full(
                (bsz, 1, hh, ww), mono_depth_const, jnp.float32)
        if return_features:
            outputs[("upconv_feat", i)] = x                  # NHCW, bf16
    return outputs


# ---------------------------------------------------------------------------
# Pure-JAX reference for the fused ConvBlock kernel (sanity check)
# ---------------------------------------------------------------------------
def _reference_convblock(xs_nchw, ws, bias, row_upsampled=None, apply_elu=True):
    n = len(xs_nchw)
    if row_upsampled is None:
        row_upsampled = (False,) * n
    acc = None
    for x, wt, up in zip(xs_nchw, ws, row_upsampled):
        xf = x.astype(jnp.bfloat16).astype(jnp.float32)
        if up:
            xf = jnp.repeat(xf, 2, axis=2)       # nearest 2x along H (rows)
        xp = jnp.pad(xf, ((0, 0), (0, 0), (1, 1), (1, 1)), mode="reflect")
        y = lax.conv_general_dilated(
            xp, wt.astype(jnp.bfloat16).astype(jnp.float32),
            window_strides=(1, 1), padding="VALID",
            dimension_numbers=("NCHW", "OIHW", "NCHW"),
            precision=lax.Precision.HIGHEST)
        acc = y if acc is None else acc + y
    acc = acc + bias.astype(jnp.float32).reshape(1, -1, 1, 1)
    if apply_elu:
        acc = jnp.where(acc > 0.0, acc, jnp.exp(jnp.minimum(acc, 0.0)) - 1.0)
    return acc


# ---------------------------------------------------------------------------
if __name__ == "__main__":
    key = jax.random.PRNGKey(0)
    B = 2
    num_ch_enc = (4, 8, 16, 32, 64)
    spatial = (64, 32, 16, 8, 4)               # encoder feature resolutions
    mono_bins, reg_c = 8, 4
    scales = (0, 1, 2, 3)
    min_d, max_d = 0.1, 10.0

    keys = jax.random.split(key, 12)
    feats_nchw = [jax.random.normal(
        keys[i], (B, num_ch_enc[i], spatial[i], spatial[i]), jnp.float32)
        for i in range(5)]
    params = init_params(keys[5], num_ch_enc)

    def swap_hc(x):                            # NCHW <-> NHCW (self-inverse)
        return jnp.transpose(x, (0, 2, 1, 3))

    # --- sanity: single-input ConvBlock (row-tiled grid) --------------------
    x1 = jax.random.normal(keys[6], (B, 16, 32, 32), jnp.float32)      # NCHW
    w1 = jax.random.normal(keys[7], (48, 16, 3, 3), jnp.float32) / math.sqrt(9 * 16)
    b1 = 0.01 * jax.random.normal(keys[8], (48,), jnp.float32)
    got1 = swap_hc(conv_block([swap_hc(x1)], [w1], b1)).astype(jnp.float32)
    want1 = _reference_convblock([x1], [w1], b1)
    assert got1.shape == want1.shape, (got1.shape, want1.shape)
    assert bool(jnp.allclose(got1, want1, atol=5e-2, rtol=5e-2)), \
        "ConvBlock kernel mismatch vs lax.conv reference (single input)"

    # --- sanity: fused concat + fused 2x row-upsample (odd row count) -------
    xa = jax.random.normal(keys[9], (B, 24, 6, 20), jnp.float32)    # upsampled
    xb = jax.random.normal(keys[10], (B, 8, 12, 20), jnp.float32)   # skip feat
    wc = jax.random.normal(keys[11], (32, 32, 3, 3), jnp.float32) / math.sqrt(9 * 32)
    bc = 0.01 * jax.random.normal(jax.random.fold_in(key, 99), (32,), jnp.float32)
    got2 = swap_hc(conv_block([swap_hc(xa), swap_hc(xb)],
                              [wc[:, :24], wc[:, 24:]], bc,
                              row_upsampled=(True, False))).astype(jnp.float32)
    want2 = _reference_convblock([xa, xb], [wc[:, :24], wc[:, 24:]], bc,
                                 row_upsampled=(True, False))
    assert got2.shape == want2.shape, (got2.shape, want2.shape)
    assert bool(jnp.allclose(got2, want2, atol=5e-2, rtol=5e-2)), \
        "ConvBlock kernel mismatch vs lax.conv reference (concat + upsample)"

    # --- full decoder forward ------------------------------------------------
    fwd = jax.jit(functools.partial(
        depth_decoder3d_forward, scales=scales, mono_bins=mono_bins,
        reg_c=reg_c, min_d=min_d, max_d=max_d, return_features=True))
    outputs = jax.block_until_ready(fwd(feats_nchw, params))

    expected = mono_bins * (min_d + max_d) / 2.0   # sum(linspace(min_d,max_d))
    for i in scales:
        md = outputs[("mono_depth", i)]
        hw = (spatial[0] * 2) // (2 ** i)
        assert md.shape == (B, 1, hw, hw), md.shape
        assert md.dtype == jnp.float32
        assert bool(jnp.all(jnp.isfinite(md)))
        assert bool(jnp.allclose(md, expected, rtol=1e-4, atol=1e-3)), ("mono_depth", i)
    for i in range(5):
        ft = outputs[("upconv_feat", i)]
        hw = (spatial[0] * 2) // (2 ** i)
        assert ft.shape == (B, hw, NUM_CH_DEC[i], hw), (i, ft.shape)
        assert bool(jnp.all(jnp.isfinite(ft.astype(jnp.float32))))

    print("KERNEL_OK")
</pallas_src>

<mosaic_0001>
module attributes {stable_mosaic.version = 11 : i64} {
  func.func @kernel(%arg0: i32, %arg1: i32, %arg2: memref<1x32x16x32xbf16, #tpu.memory_space<vmem>>, %arg3: memref<48x144xbf16, #tpu.memory_space<vmem>>, %arg4: memref<48x1xf32, #tpu.memory_space<vmem>>, %arg5: memref<1x16x48x32xbf16, #tpu.memory_space<vmem>>) attributes {dimension_semantics = [#tpu.dimension_semantics<parallel>, #tpu.dimension_semantics<parallel>], iteration_bounds = array<i64: 2, 2>, scalar_prefetch = 0 : i64, scratch_operands = 0 : i64, tpu.core_type = #tpu.core_type<tc>, window_params = [{transform_indices = @transform_0, window_bounds = array<i64: 1, 32, 16, 32>}, {pipeline_mode = #tpu.pipeline_mode<synchronous>, transform_indices = @transform_1, window_bounds = array<i64: 48, 144>}, {pipeline_mode = #tpu.pipeline_mode<synchronous>, transform_indices = @transform_2, window_bounds = array<i64: 48, 1>}, {transform_indices = @transform_3, window_bounds = array<i64: 1, 16, 48, 32>}]} {
    %c16_i32 = arith.constant 16 : i32
    %0 = arith.muli %arg1, %c16_i32 : i32
    %c0_i32 = arith.constant 0 : i32
    %c16_i32_0 = arith.constant 16 : i32
    %1 = arith.addi %c0_i32, %c16_i32_0 : i32
    %c1_i32 = arith.constant 1 : i32
    scf.for %arg6 = %c0_i32 to %1 step %c1_i32  : i32 {
      %2 = arith.addi %0, %arg6 : i32
      %c-1_i32 = arith.constant -1 : i32
      %3 = arith.addi %2, %c-1_i32 : i32
      %4 = math.absi %3 : i32
      %c31_i32 = arith.constant 31 : i32
      %5 = arith.cmpi sgt, %4, %c31_i32 : i32
      %c62_i32 = arith.constant 62 : i32
      %6 = arith.subi %c62_i32, %4 : i32
      %7 = arith.select %5, %6, %4 : i32
      %c0 = arith.constant 0 : index
      %8 = arith.index_cast %7 : i32 to index
      %c0_2 = arith.constant 0 : index
      %c0_3 = arith.constant 0 : index
      %9 = vector.load %arg2[%c0, %8, %c0_2, %c0_3] : memref<1x32x16x32xbf16, #tpu.memory_space<vmem>>, vector<1x1x16x32xbf16>
      %10 = vector.shape_cast %9 : vector<1x1x16x32xbf16> to vector<16x32xbf16>
      %11 = vector.extract_strided_slice %10 {offsets = [0, 1], sizes = [16, 1], strides = [1, 1]} : vector<16x32xbf16> to vector<16x1xbf16>
      %12 = vector.extract_strided_slice %10 {offsets = [0, 0], sizes = [16, 31], strides = [1, 1]} : vector<16x32xbf16> to vector<16x31xbf16>
      %13 = tpu.concatenate %11, %12 in 1 : vector<16x1xbf16>, vector<16x31xbf16> -> vector<16x32xbf16>
      %14 = vector.extract_strided_slice %10 {offsets = [0, 1], sizes = [16, 31], strides = [1, 1]} : vector<16x32xbf16> to vector<16x31xbf16>
      %15 = vector.extract_strided_slice %10 {offsets = [0, 30], sizes = [16, 1], strides = [1, 1]} : vector<16x32xbf16> to vector<16x1xbf16>
      %16 = tpu.concatenate %14, %15 in 1 : vector<16x31xbf16>, vector<16x1xbf16> -> vector<16x32xbf16>
      %c0_i32_4 = arith.constant 0 : i32
      %17 = arith.addi %2, %c0_i32_4 : i32
      %18 = math.absi %17 : i32
      %c31_i32_5 = arith.constant 31 : i32
      %19 = arith.cmpi sgt, %18, %c31_i32_5 : i32
      %c62_i32_6 = arith.constant 62 : i32
      %20 = arith.subi %c62_i32_6, %18 : i32
      %21 = arith.select %19, %20, %18 : i32
      %c0_7 = arith.constant 0 : index
      %22 = arith.index_cast %21 : i32 to index
      %c0_8 = arith.constant 0 : index
      %c0_9 = arith.constant 0 : index
      %23 = vector.load %arg2[%c0_7, %22, %c0_8, %c0_9] : memref<1x32x16x32xbf16, #tpu.memory_space<vmem>>, vector<1x1x16x32xbf16>
      %24 = vector.shape_cast %23 : vector<1x1x16x32xbf16> to vector<16x32xbf16>
      %25 = vector.extract_strided_slice %24 {offsets = [0, 1], sizes = [16, 1], strides = [1, 1]} : vector<16x32xbf16> to vector<16x1xbf16>
      %26 = vector.extract_strided_slice %24 {offsets = [0, 0], sizes = [16, 31], strides = [1, 1]} : vector<16x32xbf16> to vector<16x31xbf16>
      %27 = tpu.concatenate %25, %26 in 1 : vector<16x1xbf16>, vector<16x31xbf16> -> vector<16x32xbf16>
      %28 = vector.extract_strided_slice %24 {offsets = [0, 1], sizes = [16, 31], strides = [1, 1]} : vector<16x32xbf16> to vector<16x31xbf16>
      %29 = vector.extract_strided_slice %24 {offsets = [0, 30], sizes = [16, 1], strides = [1, 1]} : vector<16x32xbf16> to vector<16x1xbf16>
      %30 = tpu.concatenate %28, %29 in 1 : vector<16x31xbf16>, vector<16x1xbf16> -> vector<16x32xbf16>
      %c1_i32_10 = arith.constant 1 : i32
      %31 = arith.addi %2, %c1_i32_10 : i32
      %32 = math.absi %31 : i32
      %c31_i32_11 = arith.constant 31 : i32
      %33 = arith.cmpi sgt, %32, %c31_i32_11 : i32
      %c62_i32_12 = arith.constant 62 : i32
      %34 = arith.subi %c62_i32_12, %32 : i32
      %35 = arith.select %33, %34, %32 : i32
      %c0_13 = arith.constant 0 : index
      %36 = arith.index_cast %35 : i32 to index
      %c0_14 = arith.constant 0 : index
      %c0_15 = arith.constant 0 : index
      %37 = vector.load %arg2[%c0_13, %36, %c0_14, %c0_15] : memref<1x32x16x32xbf16, #tpu.memory_space<vmem>>, vector<1x1x16x32xbf16>
      %38 = vector.shape_cast %37 : vector<1x1x16x32xbf16> to vector<16x32xbf16>
      %39 = vector.extract_strided_slice %38 {offsets = [0, 1], sizes = [16, 1], strides = [1, 1]} : vector<16x32xbf16> to vector<16x1xbf16>
      %40 = vector.extract_strided_slice %38 {offsets = [0, 0], sizes = [16, 31], strides = [1, 1]} : vector<16x32xbf16> to vector<16x31xbf16>
      %41 = tpu.concatenate %39, %40 in 1 : vector<16x1xbf16>, vector<16x31xbf16> -> vector<16x32xbf16>
      %42 = vector.extract_strided_slice %38 {offsets = [0, 1], sizes = [16, 31], strides = [1, 1]} : vector<16x32xbf16> to vector<16x31xbf16>
      %43 = vector.extract_strided_slice %38 {offsets = [0, 30], sizes = [16, 1], strides = [1, 1]} : vector<16x32xbf16> to vector<16x1xbf16>
      %44 = tpu.concatenate %42, %43 in 1 : vector<16x31xbf16>, vector<16x1xbf16> -> vector<16x32xbf16>
      %45 = tpu.concatenate %13, %10, %16, %27, %24, %30, %41, %38, %44 in 0 : vector<16x32xbf16>, vector<16x32xbf16>, vector<16x32xbf16>, vector<16x32xbf16>, vector<16x32xbf16>, vector<16x32xbf16>, vector<16x32xbf16>, vector<16x32xbf16>, vector<16x32xbf16> -> vector<144x32xbf16>
      %c0_16 = arith.constant 0 : index
      %c0_17 = arith.constant 0 : index
      %46 = vector.load %arg3[%c0_16, %c0_17] : memref<48x144xbf16, #tpu.memory_space<vmem>>, vector<48x144xbf16>
      %cst = arith.constant dense<0.000000e+00> : vector<48x32xf32>
      %47 = tpu.matmul %46, %45, %cst {dimension_numbers = #tpu.dot_dimension_numbers<[1], [0], [0], [1], [0, 0, 1, 1], [], []>} : vector<48x144xbf16>, vector<144x32xbf16>, vector<48x32xf32> -> vector<48x32xf32>
      %c0_18 = arith.constant 0 : index
      %c0_19 = arith.constant 0 : index
      %48 = vector.load %arg4[%c0_18, %c0_19] : memref<48x1xf32, #tpu.memory_space<vmem>>, vector<48x1xf32>
      %49 = vector.broadcast %48 : vector<48x1xf32> to vector<48x32xf32>
      %50 = arith.addf %47, %49 : vector<48x32xf32>
      %cst_20 = arith.constant 0.000000e+00 : f32
      %51 = vector.broadcast %cst_20 : f32 to vector<48x32xf32>
      %52 = arith.cmpf ogt, %50, %51 : vector<48x32xf32>
      %cst_21 = arith.constant 0.000000e+00 : f32
      %53 = vector.broadcast %cst_21 : f32 to vector<48x32xf32>
      %54 = arith.minimumf %50, %53 : vector<48x32xf32>
      %55 = math.exp %54 : vector<48x32xf32>
      %cst_22 = arith.constant 1.000000e+00 : f32
      %56 = vector.broadcast %cst_22 : f32 to vector<48x32xf32>
      %57 = arith.subf %55, %56 : vector<48x32xf32>
      %58 = arith.select %52, %50, %57 : vector<48x32xi1>, vector<48x32xf32>
      %59 = arith.truncf %58 : vector<48x32xf32> to vector<48x32xbf16>
      %c0_23 = arith.constant 0 : index
      %60 = arith.index_cast %arg6 : i32 to index
      %c0_24 = arith.constant 0 : index
      %c0_25 = arith.constant 0 : index
      %61 = vector.load %arg5[%c0_23, %60, %c0_24, %c0_25] : memref<1x16x48x32xbf16, #tpu.memory_space<vmem>>, vector<1x1x48x32xbf16>
      %62 = vector.shape_cast %61 : vector<1x1x48x32xbf16> to vector<48x32xbf16>
      %63 = vector.shape_cast %59 : vector<48x32xbf16> to vector<1x1x48x32xbf16>
      tpu.vector_store %arg5[%c0_23, %60, %c0_24, %c0_25], %63 {strides = array<i32>} : memref<1x16x48x32xbf16, #tpu.memory_space<vmem>>, vector<1x1x48x32xbf16>,
    }
    %c16_i32_1 = arith.constant 16 : i32
    return
  }
  func.func @transform_0(%arg0: i32, %arg1: i32) -> (i32, i32, i32, i32) {
    %c0_i32 = arith.constant 0 : i32
    %c0_i32_0 = arith.constant 0 : i32
    %c0_i32_1 = arith.constant 0 : i32
    %c0_i32_2 = arith.constant 0 : i32
    return %arg0, %c0_i32, %c0_i32_0, %c0_i32_1 : i32, i32, i32, i32
  }
  func.func @transform_1(%arg0: i32, %arg1: i32) -> (i32, i32) {
    %c0_i32 = arith.constant 0 : i32
    %c0_i32_0 = arith.constant 0 : i32
    %c0_i32_1 = arith.constant 0 : i32
    return %c0_i32, %c0_i32_0 : i32, i32
  }
  func.func @transform_2(%arg0: i32, %arg1: i32) -> (i32, i32) {
    %c0_i32 = arith.constant 0 : i32
    %c0_i32_0 = arith.constant 0 : i32
    %c0_i32_1 = arith.constant 0 : i32
    return %c0_i32, %c0_i32_0 : i32, i32
  }
  func.func @transform_3(%arg0: i32, %arg1: i32) -> (i32, i32, i32, i32) {
    %c0_i32 = arith.constant 0 : i32
    %c0_i32_0 = arith.constant 0 : i32
    %c0_i32_1 = arith.constant 0 : i32
    return %arg0, %arg1, %c0_i32, %c0_i32_0 : i32, i32, i32, i32
  }
}

</mosaic_0001>

<llo_original>
// kernel: tpu_custom_call.1
$region0: #{tpu_custom_call.1}
  #allocation0 [shape = 'u32[]', space=smem, size = 0x4, offset = 0x4, fixed_abs, tag = 'smem constant byte address 0x4 - core index']
  #allocation1 [shape = 'u32[144,128]{1,0:T(1,128)}', space=vmem, size = 0x12000, scoped, tag = 'internal scratch']
  %s0 = inlined_call_operand.hbm [shape: bf16[2,32,16,32], index: 0, kind: input, shape index: {}]
  %s1 = inlined_call_operand.vmem [shape: bf16[48,144], index: 1, kind: input, shape index: {}]
  %s2 = inlined_call_operand.vmem [shape: f32[48,1], index: 2, kind: input, shape index: {}]
  %s3 = inlined_call_operand.vmem [shape: bf16[2,32,48,32], index: 3, kind: output, shape index: {}]
  %s4 = sld [smem:[#allocation0]]
  $region56: #{tpu_custom_call.1} parent=0
    _
  %s6 = ssub.s32 1, %s4
  %s7 = scalar_select 0, %s6, %s4
  $region1: #{tpu_custom_call.1} parent=0
    #allocation2 [shape = 'u8[262144]{0}', space=vmem, size = 0x40000, scoped, tag = 'input window, operand 0']
    #allocation3 [shape = 's32[2]{0}', space=sflag, size = 0x8, scoped, tag = 'scoped memory for tpu_custom_call.1']
    %8 = vsyncpa [#allocation3], 0
    %s9 = scalar_lea.sflag [#allocation3], 1
    %10 = vsyncpa %s9, 0
    loop: start=0, step=1, limit=6
    $region2: #{tpu_custom_call.1} parent=1 // loop_pre_header
      _
    $region3: #{tpu_custom_call.1} parent=1 // loop_header
      %s12 = sphi 0, %s16
      %p13 = scmp.ge.s32.totalorder %s12, 6
      %s19 = sphi 0, %s31
      %s20 = sphi 0, %s27
      %s21 = sphi 0, %s19
      %s22 = sphi 0, %s20
      %s23 = sphi 0, %s21
      %s24 = sphi 0, %s22
      %s34 = sphi 0, %s36
      %s37 = sphi 0, %s34
      %s38 = sphi 0, %s37
      %s54 = sphi 0, %s38
      %s58 = sphi 0, %s58
      %s60 = sphi 0, %s58
      %s61 = sphi 0, %s60
      %s75 = sphi 0, %s61
      %s79 = sphi 0, %s79
      %s81 = sphi 0, %s79
      %s82 = sphi 0, %s81
      %s96 = sphi 0, %s82
      %s104 = sphi 0, %s106
      %s107 = sphi 0, %s104
      %s108 = sphi 0, %s107
      %s124 = sphi 0, %s108
    $region4: #{tpu_custom_call.1} parent=1 // loop_header_branch
      %15 = sbr.rel (%p13) target = $region8
    $region5: #{tpu_custom_call.1} parent=1 // loop_body
      %s17 = ssub.s32 %s12, 1
      %s18 = ssub.s32 %s12, 2
      %s25 = sadd.s32 1, %s20
      %p26 = scmp.ge.s32.totalorder %s25, 2
      %s27 = scalar_select %p26, 0, %s25
      %s28 = sadd.s32 1, %s19
      %s29 = scalar_select %p26, %s28, %s19
      %p30 = scmp.ge.s32.totalorder %s29, 2
      %s31 = scalar_select %p30, 0, %s29
      %s32 = ssub.s32 %s19, %s31
      %p33 = scmp.eq.s32.totalorder %s32, 0
      %s35 = sadd.s32 %s34, 1
      %s36 = scalar_select %p33, %s34, %s35
      %p39 = pneg %p33
      %p40 = scmp.eq.s32.totalorder %s12, 3
      %p41 = por %p39, %p40
      %p42 = scmp.ne.s32.totalorder %s34, %s37
      %p43 = scmp.eq.s32.totalorder %s12, 0
      %p44 = por %p42, %p43
      %p45 = scmp.ne.s32.totalorder %s34, %s37
      %p46 = scmp.eq.s32.totalorder %s17, 3
      %p47 = por %p45, %p46
      %p48 = scmp.ne.s32.totalorder %s37, %s38
      %p49 = scmp.eq.s32.totalorder %s17, 0
      %p50 = por %p48, %p49
      %p51 = scmp.ne.s32.totalorder %s37, %s38
      %p52 = scmp.eq.s32.totalorder %s18, 3
      %p53 = por %p51, %p52
      %p55 = scmp.ne.s32.totalorder %s38, %s54
      %p56 = scmp.eq.s32.totalorder %s18, 0
      %p57 = por %p55, %p56
      %s59 = sadd.s32 %s58, 1
      %p62 = scmp.eq.s32.totalorder %s12, 3
      %p63 = scmp.ne.s32.totalorder %s58, %s60
      %p64 = scmp.eq.s32.totalorder %s12, 0
      %p65 = por %p63, %p64
      %p66 = scmp.ne.s32.totalorder %s58, %s60
      %p67 = scmp.eq.s32.totalorder %s17, 3
      %p68 = por %p66, %p67
      %p69 = scmp.ne.s32.totalorder %s60, %s61
      %p70 = scmp.eq.s32.totalorder %s17, 0
      %p71 = por %p69, %p70
      %p72 = scmp.ne.s32.totalorder %s60, %s61
      %p73 = scmp.eq.s32.totalorder %s18, 3
      %p74 = por %p72, %p73
      %p76 = scmp.ne.s32.totalorder %s61, %s75
      %p77 = scmp.eq.s32.totalorder %s18, 0
      %p78 = por %p76, %p77
      %s80 = sadd.s32 %s79, 1
      %p83 = scmp.eq.s32.totalorder %s12, 3
      %p84 = scmp.ne.s32.totalorder %s79, %s81
      %p85 = scmp.eq.s32.totalorder %s12, 0
      %p86 = por %p84, %p85
      %p87 = scmp.ne.s32.totalorder %s79, %s81
      %p88 = scmp.eq.s32.totalorder %s17, 3
      %p89 = por %p87, %p88
      %p90 = scmp.ne.s32.totalorder %s81, %s82
      %p91 = scmp.eq.s32.totalorder %s17, 0
      %p92 = por %p90, %p91
      %p93 = scmp.ne.s32.totalorder %s81, %s82
      %p94 = scmp.eq.s32.totalorder %s18, 3
      %p95 = por %p93, %p94
      %p97 = scmp.ne.s32.totalorder %s82, %s96
      %p98 = scmp.eq.s32.totalorder %s18, 0
      %p99 = por %p97, %p98
      %s100 = ssub.s32 %s19, %s31
      %s101 = ssub.s32 %s20, %s27
      %s102 = sor.u32 %s100, %s101
      %p103 = scmp.eq.s32.totalorder %s102, 0
      %s105 = sadd.s32 %s104, 1
      %s106 = scalar_select %p103, %s104, %s105
      %p109 = pneg %p103
      %p110 = scmp.eq.s32.totalorder %s12, 3
      %p111 = por %p109, %p110
      %p112 = scmp.ne.s32.totalorder %s104, %s107
      %p113 = scmp.eq.s32.totalorder %s12, 0
      %p114 = por %p112, %p113
      %p115 = scmp.ne.s32.totalorder %s104, %s107
      %p116 = scmp.eq.s32.totalorder %s17, 3
      %p117 = por %p115, %p116
      %p118 = scmp.ne.s32.totalorder %s107, %s108
      %p119 = scmp.eq.s32.totalorder %s17, 0
      %p120 = por %p118, %p119
      %p121 = scmp.ne.s32.totalorder %s107, %s108
      %p122 = scmp.eq.s32.totalorder %s18, 3
      %p123 = por %p121, %p122
      %p125 = scmp.ne.s32.totalorder %s108, %s124
      %p126 = scmp.eq.s32.totalorder %s18, 0
      %p127 = por %p125, %p126
      %p128 = scmp.le.s32.totalorder 1, %s12
      %p129 = scmp.lt.s32.totalorder %s12, 5
      %p130 = pnand %p128, %p129
      %p131 = pneg %p130
      // Predicated region
      $region9: #{tpu_custom_call.1} parent=5 // pred_check
        _
      $region10: #{tpu_custom_call.1} parent=5 // pred_check_branch
        %133 = sbr.rel (%p130) target = $region12
      $region11: #{tpu_custom_call.1} parent=5 // pred_region
        %s134 = ssub.s32 %s12, 1
        // Predicated region
        $region13: #{tpu_custom_call.1} parent=11 // pred_check
          %p135 = pneg %p71
        $region14: #{tpu_custom_call.1} parent=11 // pred_check_branch
          %137 = sbr.rel (%p135) target = $region16
        $region15: #{tpu_custom_call.1} parent=11 // pred_region
          _
        $region16: #{tpu_custom_call.1} parent=11 // pred_fallthru
          _
        // Predicated region
        $region17: #{tpu_custom_call.1} parent=11 // pred_check
          %p138 = pneg %p92
        $region18: #{tpu_custom_call.1} parent=11 // pred_check_branch
          %140 = sbr.rel (%p138) target = $region20
        $region19: #{tpu_custom_call.1} parent=11 // pred_region
          _
        $region20: #{tpu_custom_call.1} parent=11 // pred_fallthru
          _
      $region12: #{tpu_custom_call.1} parent=5 // pred_fallthru
        _
      %p141 = scmp.lt.s32.totalorder %s12, 4
      // Predicated region
      $region21: #{tpu_custom_call.1} parent=5 // pred_check
        %p142 = pneg %p141
      $region22: #{tpu_custom_call.1} parent=5 // pred_check_branch
        %144 = sbr.rel (%p142) target = $region24
      $region23: #{tpu_custom_call.1} parent=5 // pred_region
        // Predicated region
        $region25: #{tpu_custom_call.1} parent=23 // pred_check
          %p145 = pneg %p44
        $region26: #{tpu_custom_call.1} parent=23 // pred_check_branch
          %147 = sbr.rel (%p145) target = $region28
        $region27: #{tpu_custom_call.1} parent=23 // pred_region
          %s148 = sand.u32 %s34, 1
          %s149 = scalar_lea.sflag [#allocation3], %s148
          %s150 = sand.u32 %s34, 1
          %s151 = smul.addr %s150, 256
          %s152 = scalar_lea.vmem [#allocation2], %s151
          %s154 = ssub.s32 4096, 4096
          %155 = vsyncadd %s149, %s154
          %s156 = smul.addr %s19, 64
          %s157 = smul.addr %s156, 64
          %s158 = scalar_lea.hbm %s0, %s157
          %s159 = sshll.u32 %s152, 4
          %s160 = int_to_ptr.vmem [resolvable:$true] %s159
          %165 = dma.hbm_to_vmem [thread:$0]  %s158, 4096, %s160, %s149, 64, 64, 4
        $region28: #{tpu_custom_call.1} parent=23 // pred_fallthru
          _
      $region24: #{tpu_custom_call.1} parent=5 // pred_fallthru
        _
      %p166 = scmp.le.s32.totalorder 1, %s12
      %p167 = scmp.lt.s32.totalorder %s12, 5
      %p168 = pnand %p166, %p167
      %p169 = pneg %p168
      // Predicated region
      $region29: #{tpu_custom_call.1} parent=5 // pred_check
        _
      $region30: #{tpu_custom_call.1} parent=5 // pred_check_branch
        %171 = sbr.rel (%p168) target = $region32
      $region31: #{tpu_custom_call.1} parent=5 // pred_region
        %s172 = ssub.s32 %s12, 1
        %s173 = sand.u32 %s37, 1
        %s174 = scalar_lea.sflag [#allocation3], %s173
        %s175 = sand.u32 %s37, 1
        %s176 = smul.addr %s175, 256
        %s177 = scalar_lea.vmem [#allocation2], %s176
        // Predicated region
        $region33: #{tpu_custom_call.1} parent=31 // pred_check
          %p178 = pneg %p50
        $region34: #{tpu_custom_call.1} parent=31 // pred_check_branch
          %180 = sbr.rel (%p178) target = $region36
        $region35: #{tpu_custom_call.1} parent=31 // pred_region
          %181 = dma.done %s174, 4096
        $region36: #{tpu_custom_call.1} parent=31 // pred_fallthru
          _
        %s182 = sand.u32 %s37, 1
        %s183 = scalar_lea.sflag [#allocation3], %s182
        %s184 = sand.u32 %s37, 1
        %s185 = smul.addr %s184, 256
        %s186 = scalar_lea.vmem [#allocation2], %s185
        %p187 = pneg %p50
        %p188 = pneg %p47
        %p189 = pneg %p71
        %p190 = pneg %p68
        %p191 = pneg %p92
        %p192 = pneg %p89
        %p193 = pneg %p120
        %p194 = pneg %p117
        %s195 = smul.u32 16, %s22
        %p196 = scmp.lt.s32.totalorder %s21, 1
        %s197 = scalar_select %p196, %s21, 1
        %p198 = scmp.lt.s32.totalorder %s195, 31
        %s199 = scalar_select %p198, %s195, 31
        %s200 = smul.addr %s199, 6
        %s201 = smul.addr %s197, 192
        %s202 = sadd.s32 %s200, %s201
        %s203 = smul.addr %s202, 4
        %s204 = scalar_lea.vmem %s3, %s203
        %s205 = smul.u32 16, %s22
        %p206 = scmp.lt.s32.totalorder %s21, 1
        %s207 = scalar_select %p206, %s21, 1
        %p208 = scmp.lt.s32.totalorder %s205, 31
        %s209 = scalar_select %p208, %s205, 31
        %s210 = smul.addr %s209, 6
        %s211 = smul.addr %s207, 192
        %s212 = sadd.s32 %s210, %s211
        %s213 = smul.addr %s212, 4
        %s214 = scalar_lea.vmem %s3, %s213
        %s215 = smul.u32 16, %s22
        %s217 = smul.u32 %s22, 16
        loop: start=0, step=1, limit=16
        $region37: #{tpu_custom_call.1} parent=31 // loop_pre_header
          _
        $region38: #{tpu_custom_call.1} parent=31 // loop_header
          %s219 = sphi 0, %s223
          %p220 = scmp.ge.s32.totalorder %s219, 16
        $region39: #{tpu_custom_call.1} parent=31 // loop_header_branch
          %222 = sbr.rel (%p220) target = $region43
        $region40: #{tpu_custom_call.1} parent=31 // loop_body
          %s224 = sadd.s32 %s217, %s219
          %s225 = sadd.s32 %s224, 4294967295
          %s226 = sshra.s32 %s225, 31
          %s227 = sadd.s32 %s225, %s226
          %s228 = sxor.u32 %s227, %s226
          %p229 = scmp.gt.s32.totalorder %s228, 31
          %s230 = ssub.s32 62, %s228
          %s231 = scalar_select %p229, %s230, %s228
          %s232 = smul.u32 %s231, 2
          %s233 = smul.addr %s232, 4
          %s234 = scalar_lea.vmem %s177, %s233 [#allocation2]
          %v235 = vld [vmem:[%s234] sm:$0xf]
          %v236 = vld [vmem:[%s234 + $0x4] sm:$0xf]
          %v239 = vunpack.c.l.b16 %v235
          %v240 = vunpack.c.l.b16 %v236
          %v241 = vpack.c.b16 %v240, %v239
          %242 = vrot.lane.b32.xlu0 %v241, 127
          %v243 = vpop.permute.xlu0 %242
          %244 = vrot.lane.b32.xlu0 %v241, 1
          %v245 = vpop.permute.xlu0 %244
          %vm246 = vcmask 7168
          %v249 = vsel %vm246, %v243, %v245
          %vm251 = vcmask 252928
          %v252 = vsel %vm251, %v243, %v245
          %s254 = sshra.s32 %s224, 31
          %s255 = sadd.s32 %s224, %s254
          %s256 = sxor.u32 %s255, %s254
          %p257 = scmp.gt.s32.totalorder %s256, 31
          %s258 = ssub.s32 62, %s256
          %s259 = scalar_select %p257, %s258, %s256
          %s260 = smul.u32 %s259, 2
          %s261 = smul.addr %s260, 4
          %s262 = scalar_lea.vmem %s177, %s261 [#allocation2]
          %v263 = vld [vmem:[%s262] sm:$0xf]
          %v264 = vld [vmem:[%s262 + $0x4] sm:$0xf]
          %v267 = vunpack.c.l.b16 %v263
          %v268 = vunpack.c.l.b16 %v264
          %v269 = vpack.c.b16 %v268, %v267
          %270 = vrot.lane.b32.xlu0 %v269, 127
          %v271 = vpop.permute.xlu0 %270
          %272 = vrot.lane.b32.xlu0 %v269, 1
          %v273 = vpop.permute.xlu0 %272
          %v276 = vsel %vm246, %v271, %v273
          %v278 = vsel %vm251, %v271, %v273
          %s280 = sadd.s32 %s224, 1
          %s281 = sshra.s32 %s280, 31
          %s282 = sadd.s32 %s280, %s281
          %s283 = sxor.u32 %s282, %s281
          %p284 = scmp.gt.s32.totalorder %s283, 31
          %s285 = ssub.s32 62, %s283
          %s286 = scalar_select %p284, %s285, %s283
          %s287 = smul.u32 %s286, 2
          %s288 = smul.addr %s287, 4
          %s289 = scalar_lea.vmem %s177, %s288 [#allocation2]
          %v290 = vld [vmem:[%s289] sm:$0xf]
          %v291 = vld [vmem:[%s289 + $0x4] sm:$0xf]
          %v294 = vunpack.c.l.b16 %v290
          %v295 = vunpack.c.l.b16 %v291
          %v296 = vpack.c.b16 %v295, %v294
          %297 = vrot.lane.b32.xlu0 %v296, 127
          %v298 = vpop.permute.xlu0 %297
          %299 = vrot.lane.b32.xlu0 %v296, 1
          %v300 = vpop.permute.xlu0 %299
          %v303 = vsel %vm246, %v298, %v300
          %v305 = vsel %vm251, %v298, %v300
          %v310 = vld [vmem:[%s1] sm:$0xff]
          %v311 = vld [vmem:[%s1 + $0x8] sm:$0xff]
          %v312 = vld [vmem:[%s1 + $0x10] sm:$0xff]
          %v313 = vld [vmem:[%s1 + $0x18] sm:$0xff]
          %v314 = vld [vmem:[%s1 + $0x20] sm:$0xff]
          %v315 = vld [vmem:[%s1 + $0x28] sm:$0xff]
          %v316 = vld [vmem:[%s2] sm:$0xff]
          %v317 = vld [vmem:[%s2 + $0x8] sm:$0xff]
          %v318 = vld [vmem:[%s2 + $0x10] sm:$0xff]
          %v319 = vld [vmem:[%s2 + $0x18] sm:$0xff]
          %v320 = vld [vmem:[%s2 + $0x20] sm:$0xff]
          %v321 = vld [vmem:[%s2 + $0x28] sm:$0xff]
          %323 = vset.pattern.permute.xlu0 0
          %324 = vperm.xlu0 %323, %v316
          %v325 = vpop.permute.xlu0 %324
          %328 = vset.pattern.permute.xlu0 0
          %329 = vperm.xlu0 %328, %v317
          %v330 = vpop.permute.xlu0 %329
          %333 = vset.pattern.permute.xlu0 0
          %334 = vperm.xlu0 %333, %v318
          %v335 = vpop.permute.xlu0 %334
          %338 = vset.pattern.permute.xlu0 0
          %339 = vperm.xlu0 %338, %v319
          %v340 = vpop.permute.xlu0 %339
          %343 = vset.pattern.permute.xlu0 0
          %344 = vperm.xlu0 %343, %v320
          %v345 = vpop.permute.xlu0 %344
          %348 = vset.pattern.permute.xlu0 0
          %349 = vperm.xlu0 %348, %v321
          %v350 = vpop.permute.xlu0 %349
          %v358 = vunpack.c.l.b16 %v310
          %v359 = vunpack.c.h.b16 %v310
          %v360 = vunpack.c.l.b16 %v311
          %v361 = vunpack.c.h.b16 %v311
          %v362 = vunpack.c.l.b16 %v312
          %v363 = vunpack.c.h.b16 %v312
          %v364 = vunpack.c.l.b16 %v313
          %v365 = vunpack.c.h.b16 %v313
          %v366 = vunpack.c.l.b16 %v314
          %v367 = vunpack.c.h.b16 %v314
          %v368 = vunpack.c.l.b16 %v315
          %v369 = vunpack.c.h.b16 %v315
          %v370 = vpack.c.b16 %v360, %v358
          %v371 = vpack.c.b16 %v361, %v359
          %v372 = vpack.c.b16 %v364, %v362
          %v373 = vpack.c.b16 %v365, %v363
          %v374 = vpack.c.b16 %v368, %v366
          %v375 = vpack.c.b16 %v369, %v367
          %vm379 = vcmask 130048
          %v381 = vsel %vm379, %v371, 0
          %v384 = vsel %vm379, %v373, 0
          %v387 = vsel %vm379, %v375, 0
          %389 = vmatprep.subr.bf16.mxu0 0
          %390 = vmatpush1.bf16.msra.mxu0 %v296
          %391 = vmatprep.subr.bf16.mxu0 0
          %392 = vmatpush1.bf16.msra.mxu0 %v303
          %393 = vmatprep.subr.bf16.mxu0 0
          %394 = vmatpush1.bf16.msra.mxu0 %v278
          %395 = vmatprep.subr.bf16.mxu0 0
          %396 = vmatpush1.bf16.msra.mxu0 %v269
          %397 = vmatprep.subr.bf16.mxu0 0
          %398 = vmatpush1.bf16.msra.mxu0 %v276
          %399 = vmatprep.subr.bf16.mxu0 0
          %400 = vmatpush1.bf16.msra.mxu0 %v252
          %401 = vmatprep.subr.bf16.mxu0 0
          %402 = vmatpush1.bf16.msra.mxu0 %v241
          %403 = vmatprep.subr.bf16.mxu0 0
          %404 = vmatpush1.bf16.msra.mxu0 %v249
          %405 = vmatprep.subr.bf16.mxu0 0
          %406 = vmatpush2.bf16.msra.mxu0 0
          %407 = vmatprep.subr.bf16.mxu0 0
          %408 = vmatpush2.bf16.msra.mxu0 0
          %409 = vmatprep.subr.bf16.mxu0 0
          %410 = vmatpush2.bf16.msra.mxu0 0
          %411 = vmatprep.subr.bf16.mxu0 0
          %412 = vmatpush2.bf16.msra.mxu0 0
          %413 = vmatprep.subr.bf16.mxu0 0
          %414 = vmatpush2.bf16.msra.mxu0 0
          %415 = vmatprep.subr.bf16.mxu0 0
          %416 = vmatpush2.bf16.msra.mxu0 0
          %417 = vmatprep.subr.bf16.mxu0 0
          %418 = vmatpush2.bf16.msra.mxu0 0
          %419 = vmatprep.subr.bf16.mxu0 0
          %420 = vmatpush2.bf16.msra.mxu0 %v305
          %421 = vmatprep.mubr.bf16.mxu0 %v381
          %422 = vmatmul.mubr.bf16.gmra.mxu0 %v370
          %v423 = vpop.f32.mrf.mxu0
          %v424 = vadd.f32 %v325, %v423
          %v425 = vpop.f32.mrf.mxu0
          %v426 = vpop.f32.mrf.mxu0
          %v427 = vadd.f32 %v330, %v426
          %v428 = vpop.f32.mrf.mxu0
          %429 = vmatprep.mubr.bf16.mxu0 %v384
          %430 = vmatmul.mubr.bf16.gmra.mxu0 %v372
          %v431 = vpop.f32.mrf.mxu0
          %v432 = vadd.f32 %v335, %v431
          %v433 = vpop.f32.mrf.mxu0
          %v434 = vpop.f32.mrf.mxu0
          %v435 = vadd.f32 %v340, %v434
          %v436 = vpop.f32.mrf.mxu0
          %437 = vmatprep.mubr.bf16.mxu0 %v387
          %438 = vmatmul.mubr.bf16.gmra.mxu0 %v374
          %v439 = vpop.f32.mrf.mxu0
          %v440 = vadd.f32 %v345, %v439
          %v441 = vpop.f32.mrf.mxu0
          %v442 = vpop.f32.mrf.mxu0
          %v443 = vadd.f32 %v350, %v442
          %v444 = vpop.f32.mrf.mxu0
          %445 = vdwg.mxu0
          %vm446 = vcmp.gt.f32.partialorder %v424, 0.0
          %vm447 = vcmp.gt.f32.partialorder %v427, 0.0
          %vm448 = vcmp.gt.f32.partialorder %v432, 0.0
          %vm449 = vcmp.gt.f32.partialorder %v435, 0.0
          %vm450 = vcmp.gt.f32.partialorder %v440, 0.0
          %vm451 = vcmp.gt.f32.partialorder %v443, 0.0
          %v452 = vmin.f32 %v424, 0.0
          %v453 = vmin.f32 %v427, 0.0
          %v454 = vmin.f32 %v432, 0.0
          %v455 = vmin.f32 %v435, 0.0
          %v456 = vmin.f32 %v440, 0.0
          %v457 = vmin.f32 %v443, 0.0
          %v458 = vmul.f32 %v452, 1.442695
          %v459 = vpow.pop %v458
          %v460 = vmul.f32 %v453, 1.442695
          %v461 = vpow.pop %v460
          %v462 = vmul.f32 %v454, 1.442695
          %v463 = vpow.pop %v462
          %v464 = vmul.f32 %v455, 1.442695
          %v465 = vpow.pop %v464
          %v466 = vmul.f32 %v456, 1.442695
          %v467 = vpow.pop %v466
          %v468 = vmul.f32 %v457, 1.442695
          %v469 = vpow.pop %v468
          %v470 = vsub.f32 %v459, 1.0
          %v471 = vsub.f32 %v461, 1.0
          %v472 = vsub.f32 %v463, 1.0
          %v473 = vsub.f32 %v465, 1.0
          %v474 = vsub.f32 %v467, 1.0
          %v475 = vsub.f32 %v469, 1.0
          %v476 = vsel %vm446, %v424, %v470
          %v477 = vsel %vm447, %v427, %v471
          %v478 = vsel %vm448, %v432, %v472
          %v479 = vsel %vm449, %v435, %v473
          %v480 = vsel %vm450, %v440, %v474
          %v481 = vsel %vm451, %v443, %v475
          %v482 = vpack.c.bf16 %v477, %v476
          %v483 = vpack.c.bf16 %v479, %v478
          %v484 = vpack.c.bf16 %v481, %v480
          %v488 = vunpack.c.l.b16 %v482
          %v489 = vunpack.c.h.b16 %v482
          %v490 = vunpack.c.l.b16 %v483
          %v491 = vunpack.c.h.b16 %v483
          %v492 = vunpack.c.l.b16 %v484
          %v493 = vunpack.c.h.b16 %v484
          %v494 = vpack.c.b16 %v488, %v488
          %v495 = vpack.c.b16 %v489, %v489
          %v496 = vpack.c.b16 %v490, %v490
          %v497 = vpack.c.b16 %v491, %v491
          %v498 = vpack.c.b16 %v492, %v492
          %v499 = vpack.c.b16 %v493, %v493
          %s506 = smul.u32 %s219, 6
          %s507 = smul.addr %s506, 4
          %s508 = scalar_lea.vmem %s214, %s507
          %vm509 = vcmask 257024
          %510 = vst.msk [vmem:[%s508] sm:$0xf] %vm509, %v494
          %511 = vst.msk [vmem:[%s508 + $0x4] sm:$0xf] %vm509, %v495
          %512 = vst.msk [vmem:[%s508 + $0x8] sm:$0xf] %vm509, %v496
          %513 = vst.msk [vmem:[%s508 + $0xc] sm:$0xf] %vm509, %v497
          %514 = vst.msk [vmem:[%s508 + $0x10] sm:$0xf] %vm509, %v498
          %515 = vst.msk [vmem:[%s508 + $0x14] sm:$0xf] %vm509, %v499
        $region41: #{tpu_custom_call.1} parent=31 // loop_footer
          %s223 = sadd.s32 1, %s219
        $region42: #{tpu_custom_call.1} parent=31 // loop_footer_branch
          %218 = sbr.rel target = $region38
        $region43: #{tpu_custom_call.1} parent=31 // loop_exit
          _
        %s516 = smul.u32 16, %s22
        %p517 = scmp.lt.s32.totalorder %s21, 1
        %s518 = scalar_select %p517, %s21, 1
        %p519 = scmp.lt.s32.totalorder %s516, 31
        %s520 = scalar_select %p519, %s516, 31
        %s521 = smul.addr %s520, 6
        %s522 = smul.addr %s518, 192
        %s523 = sadd.s32 %s521, %s522
        %s524 = smul.addr %s523, 4
        %s525 = scalar_lea.vmem %s3, %s524
        // Predicated region
        $region44: #{tpu_custom_call.1} parent=31 // pred_check
          %p526 = pneg %p117
        $region45: #{tpu_custom_call.1} parent=31 // pred_check_branch
          %528 = sbr.rel (%p526) target = $region47
        $region46: #{tpu_custom_call.1} parent=31 // pred_region
          %s529 = smul.u32 16, %s22
        $region47: #{tpu_custom_call.1} parent=31 // pred_fallthru
          _
      $region32: #{tpu_custom_call.1} parent=5 // pred_fallthru
        _
      %p530 = scmp.le.s32.totalorder 2, %s12
      // Predicated region
      $region48: #{tpu_custom_call.1} parent=5 // pred_check
        %p531 = pneg %p530
      $region49: #{tpu_custom_call.1} parent=5 // pred_check_branch
        %533 = sbr.rel (%p531) target = $region51
      $region50: #{tpu_custom_call.1} parent=5 // pred_region
        %s534 = ssub.s32 %s12, 2
        // Predicated region
        $region52: #{tpu_custom_call.1} parent=50 // pred_check
          %p535 = pneg %p123
        $region53: #{tpu_custom_call.1} parent=50 // pred_check_branch
          %537 = sbr.rel (%p535) target = $region55
        $region54: #{tpu_custom_call.1} parent=50 // pred_region
          %s538 = smul.u32 16, %s24
          %p539 = scmp.lt.s32.totalorder %s23, 1
          %s540 = scalar_select %p539, %s23, 1
          %p541 = scmp.lt.s32.totalorder %s538, 31
          %s542 = scalar_select %p541, %s538, 31
          %s543 = smul.addr %s542, 6
          %s544 = smul.addr %s540, 192
          %s545 = sadd.s32 %s543, %s544
          %s546 = smul.addr %s545, 4
          %s547 = scalar_lea.vmem %s3, %s546
        $region55: #{tpu_custom_call.1} parent=50 // pred_fallthru
          _
      $region51: #{tpu_custom_call.1} parent=5 // pred_fallthru
        _
    $region6: #{tpu_custom_call.1} parent=1 // loop_footer
      %s16 = sadd.s32 1, %s12
    $region7: #{tpu_custom_call.1} parent=1 // loop_footer_branch
      %11 = sbr.rel target = $region3
    $region8: #{tpu_custom_call.1} parent=1 // loop_exit
      _
    %548 = vsyncpa [#allocation3], 1
    %s549 = scalar_lea.sflag [#allocation3], 1
    %550 = vsyncpa %s549, 1

</llo_original>
